<compile_context>
chip_gen: v6e
topology: v6e:2x2x1
jax: 0.10.0
libtpu: 0.0.40
codegen_flags: <defaults>
</compile_context>

<pallas_src>
import jax
import jax.numpy as jnp
from jax.experimental import pallas as pl
from jax.experimental.pallas import tpu as pltpu


def _round_up(x, m):
    return ((x + m - 1) // m) * m


def linear_kernel(x_ref, w_ref, b_ref, o_ref):
    # In-kernel cast to the MXU compute dtype (bf16): avoids a separate
    # wrapper-side HBM pass over x; f32 accumulation on the MXU.
    x = x_ref[...].astype(w_ref.dtype)
    acc = jnp.dot(x, w_ref[...], preferred_element_type=jnp.float32)
    o_ref[...] = (acc + b_ref[...]).astype(o_ref.dtype)


def prepare_linear_params(weight, bias, *, compute_dtype=jnp.bfloat16):
    """One-time parameter prep: W [Dout, Din] (PyTorch layout) -> padded W.T
    [Din_p, Dout_p] in bf16, bias -> [1, Dout_p] in f32.  Do this ONCE per
    weight (it costs a full HBM pass over W), not per forward call."""
    Dout, Din = weight.shape
    Din_p = _round_up(Din, 128)
    Dout_p = _round_up(Dout, 128)
    w_p = jnp.zeros((Din_p, Dout_p), compute_dtype).at[:Din, :Dout].set(
        weight.T.astype(compute_dtype))
    b_p = jnp.zeros((1, Dout_p), jnp.float32).at[0, :Dout].set(
        bias.astype(jnp.float32))
    return w_p, b_p


def linear_forward(x, w_p, b_p, out_features):
    """x: [B, Din]; w_p: [Din_p, Dout_p] (from prepare_linear_params);
    b_p: [1, Dout_p]; returns [B, out_features] in x.dtype."""
    B, Din = x.shape
    Din_p, Dout_p = w_p.shape
    assert Din <= Din_p and out_features <= Dout_p
    x_bytes = jnp.dtype(x.dtype).itemsize

    # Batch tile: multiple of 16 (bf16 sublane packing); big batches get
    # 512-row tiles to amortize the ~0.35 us/step grid overhead.
    TM = min(512, _round_up(B, 16))
    B_p = _round_up(B, TM)

    # Dout tile: lane-dense 128-multiple, capped at 512. Bounds the resident-W
    # footprint (v7x: 64 MiB VMEM) and exposes a second parallel grid axis.
    TN = min(512, Dout_p)
    grid = (B_p // TM, Dout_p // TN)

    # Aligned fast path: no wrapper pad pass over x (bf16 cast happens in-kernel).
    if B_p == B and Din_p == Din:
        x_in = x
    else:
        x_in = jnp.zeros((B_p, Din_p), x.dtype).at[:B, :Din].set(x)

    # W / bias are grid-resident when a single Dout tile covers them: no point
    # double-buffering a constant block (pure VMEM waste on v7x).
    n_wbuf = 1 if grid[1] == 1 else 2
    w_mode = pl.Buffered(n_wbuf)

    # Explicit VMEM budget: double-buffered x/out tiles + W/bias buffers + margin.
    budget = (2 * TM * Din_p * x_bytes
              + n_wbuf * (Din_p * TN * 2 + TN * 4)
              + 2 * TM * TN * x_bytes)
    vmem_limit = min(max(budget + (4 << 20), 32 << 20), 64 << 20)

    cost = pl.CostEstimate(
        flops=2 * B_p * Din_p * Dout_p,
        transcendentals=0,
        bytes_accessed=(B_p * Din_p * x_bytes          # x
                        + Din_p * Dout_p * 2           # W (bf16)
                        + Dout_p * 4                   # bias
                        + B_p * Dout_p * x_bytes),     # out
    )

    out = pl.pallas_call(
        linear_kernel,
        out_shape=jax.ShapeDtypeStruct((B_p, Dout_p), x.dtype),
        grid=grid,
        in_specs=[
            pl.BlockSpec((TM, Din_p), lambda i, j: (i, 0)),           # x: pipelined
            pl.BlockSpec((Din_p, TN), lambda i, j: (0, j),
                         pipeline_mode=w_mode),                       # W
            pl.BlockSpec((1, TN), lambda i, j: (0, j),
                         pipeline_mode=w_mode),                       # bias
        ],
        out_specs=pl.BlockSpec((TM, TN), lambda i, j: (i, j)),
        compiler_params=pltpu.CompilerParams(
            # Both axes independent -> parallel (megacore sharding on v7x).
            dimension_semantics=("parallel", "parallel"),
            vmem_limit_bytes=vmem_limit,
        ),
        cost_estimate=cost,
    )(x_in, w_p, b_p)

    if B_p == B and Dout_p == out_features:
        return out
    return out[:B, :out_features]


if __name__ == "__main__":
    key = jax.random.PRNGKey(0)
    kx, kw, kb, kx2, kw2, kb2 = jax.random.split(key, 6)

    # Case 1: small, unaligned shapes, matching LinearRegression(input_dim, output_dim).
    batch, input_dim, output_dim = 8, 32, 16
    bound = 1.0 / (input_dim ** 0.5)
    w_pt = jax.random.uniform(kw, (output_dim, input_dim), jnp.float32,
                              minval=-bound, maxval=bound)   # PyTorch layout [out, in]
    b = jax.random.uniform(kb, (output_dim,), jnp.float32,
                           minval=-bound, maxval=bound)
    x = jax.random.normal(kx, (batch, input_dim), jnp.float32)

    w_p, b_p = prepare_linear_params(w_pt, b)    # once per weight, not per call
    y = jax.block_until_ready(linear_forward(x, w_p, b_p, output_dim))

    # Reference check vs plain f32 JAX (same semantics as torch nn.Linear).
    # Tolerance loosened because the MXU inputs are bf16 (f32 accumulation).
    y_ref = x @ w_pt.T + b
    assert y.shape == (batch, output_dim)
    assert jnp.allclose(y, y_ref, atol=2e-2, rtol=2e-2)

    # Case 2: 128-aligned shapes exercise the no-pad fast path for x.
    batch2, in2, out2 = 128, 128, 256
    bound2 = 1.0 / (in2 ** 0.5)
    w2 = jax.random.uniform(kw2, (out2, in2), jnp.float32, minval=-bound2, maxval=bound2)
    b2 = jax.random.uniform(kb2, (out2,), jnp.float32, minval=-bound2, maxval=bound2)
    x2 = jax.random.normal(kx2, (batch2, in2), jnp.float32)

    w2_p, b2_p = prepare_linear_params(w2, b2)
    y2 = jax.block_until_ready(linear_forward(x2, w2_p, b2_p, out2))
    y2_ref = x2 @ w2.T + b2
    assert y2.shape == (batch2, out2)
    assert jnp.allclose(y2, y2_ref, atol=2e-2, rtol=2e-2)

    print("KERNEL_OK")
</pallas_src>

<mosaic_0001>
module attributes {stable_mosaic.version = 11 : i64} {
  func.func @linear_kernel(%arg0: i32, %arg1: i32, %arg2: memref<16x128xf32, #tpu.memory_space<vmem>>, %arg3: memref<128x128xbf16, #tpu.memory_space<vmem>>, %arg4: memref<1x128xf32, #tpu.memory_space<vmem>>, %arg5: memref<16x128xf32, #tpu.memory_space<vmem>>) attributes {dimension_semantics = [#tpu.dimension_semantics<parallel>, #tpu.dimension_semantics<parallel>], iteration_bounds = array<i64: 1, 1>, scalar_prefetch = 0 : i64, scratch_operands = 0 : i64, tpu.core_type = #tpu.core_type<tc>, window_params = [{transform_indices = @transform_0, window_bounds = array<i64: 16, 128>}, {pipeline_mode = #tpu.pipeline_mode<synchronous>, transform_indices = @transform_1, window_bounds = array<i64: 128, 128>}, {pipeline_mode = #tpu.pipeline_mode<synchronous>, transform_indices = @transform_2, window_bounds = array<i64: 1, 128>}, {transform_indices = @transform_3, window_bounds = array<i64: 16, 128>}]} {
    %c0 = arith.constant 0 : index
    %c0_0 = arith.constant 0 : index
    %0 = vector.load %arg2[%c0, %c0_0] : memref<16x128xf32, #tpu.memory_space<vmem>>, vector<16x128xf32>
    %1 = arith.truncf %0 : vector<16x128xf32> to vector<16x128xbf16>
    %c0_1 = arith.constant 0 : index
    %c0_2 = arith.constant 0 : index
    %2 = vector.load %arg3[%c0_1, %c0_2] : memref<128x128xbf16, #tpu.memory_space<vmem>>, vector<128x128xbf16>
    %cst = arith.constant dense<0.000000e+00> : vector<16x128xf32>
    %3 = tpu.matmul %1, %2, %cst {dimension_numbers = #tpu.dot_dimension_numbers<[1], [0], [0], [1], [0, 0, 1, 1], [], []>} : vector<16x128xbf16>, vector<128x128xbf16>, vector<16x128xf32> -> vector<16x128xf32>
    %c0_3 = arith.constant 0 : index
    %c0_4 = arith.constant 0 : index
    %4 = vector.load %arg4[%c0_3, %c0_4] : memref<1x128xf32, #tpu.memory_space<vmem>>, vector<1x128xf32>
    %5 = vector.broadcast %4 : vector<1x128xf32> to vector<16x128xf32>
    %6 = arith.addf %3, %5 : vector<16x128xf32>
    %c0_5 = arith.constant 0 : index
    %c0_6 = arith.constant 0 : index
    %7 = vector.load %arg5[%c0_5, %c0_6] : memref<16x128xf32, #tpu.memory_space<vmem>>, vector<16x128xf32>
    tpu.vector_store %arg5[%c0_5, %c0_6], %6 {strides = array<i32>} : memref<16x128xf32, #tpu.memory_space<vmem>>, vector<16x128xf32>,
    return
  }
  func.func @transform_0(%arg0: i32, %arg1: i32) -> (i32, i32) {
    %c0_i32 = arith.constant 0 : i32
    %c0_i32_0 = arith.constant 0 : i32
    return %arg0, %c0_i32 : i32, i32
  }
  func.func @transform_1(%arg0: i32, %arg1: i32) -> (i32, i32) {
    %c0_i32 = arith.constant 0 : i32
    %c0_i32_0 = arith.constant 0 : i32
    return %c0_i32, %arg1 : i32, i32
  }
  func.func @transform_2(%arg0: i32, %arg1: i32) -> (i32, i32) {
    %c0_i32 = arith.constant 0 : i32
    %c0_i32_0 = arith.constant 0 : i32
    return %c0_i32, %arg1 : i32, i32
  }
  func.func @transform_3(%arg0: i32, %arg1: i32) -> (i32, i32) {
    %c0_i32 = arith.constant 0 : i32
    return %arg0, %arg1 : i32, i32
  }
}

</mosaic_0001>

<llo_original>
// kernel: tpu_custom_call.1
$region0: #{tpu_custom_call.1}
  #allocation0 [shape = 'u32[]', space=smem, size = 0x4, offset = 0x4, fixed_abs, tag = 'smem constant byte address 0x4 - core index']
  #allocation1 [shape = 'u32[144,128]{1,0:T(1,128)}', space=vmem, size = 0x12000, scoped, tag = 'internal scratch']
  %s0 = inlined_call_operand.hbm [shape: f32[16,128], index: 0, kind: input, shape index: {}]
  %s1 = inlined_call_operand.hbm [shape: bf16[128,128], index: 1, kind: input, shape index: {}]
  %s2 = inlined_call_operand.vmem [shape: f32[1,128], index: 2, kind: input, shape index: {}]
  %s3 = inlined_call_operand.hbm [shape: f32[16,128], index: 3, kind: output, shape index: {}]
  %s4 = sld [smem:[#allocation0]]
  $region30: #{tpu_custom_call.1} parent=0
    _
  %s6 = ssub.s32 1, %s4
  %s7 = scalar_select 0, %s6, %s4
  $region1: #{tpu_custom_call.1} parent=0
    #allocation2 [shape = 'u8[8192]{0}', space=vmem, size = 0x2000, scoped, tag = 'input window, operand 0, single buffered']
    #allocation3 [shape = 's32[1]{0}', space=sflag, size = 0x4, scoped, tag = 'scoped memory for tpu_custom_call.1']
    #allocation4 [shape = 's32[1]{0}', space=sflag, size = 0x4, scoped, tag = 'scoped memory for tpu_custom_call.1']
    #allocation5 [shape = 'u8[32768]{0}', space=vmem, size = 0x8000, scoped, tag = 'input window, operand 1, single buffered']
    #allocation6 [shape = 's32[1]{0}', space=sflag, size = 0x4, scoped, tag = 'scoped memory for tpu_custom_call.1']
    #allocation7 [shape = 'u8[8192]{0}', space=vmem, size = 0x2000, scoped, tag = 'output window, operand 0, single buffered']
    %8 = vsyncpa [#allocation3], 0
    %9 = vsyncpa [#allocation6], 0
    %10 = vsyncpa [#allocation4], 0
    // Predicated region
    $region2: #{tpu_custom_call.1} parent=1 // pred_check
      _
    $region3: #{tpu_custom_call.1} parent=1 // pred_check_branch
      %12 = sbr.rel (0) target = $region5
    $region4: #{tpu_custom_call.1} parent=1 // pred_region
      %s14 = ssub.s32 256, 256
      %15 = vsyncadd [#allocation3], %s14
      %s16 = sshll.u32 [#allocation2], 4
      %s17 = int_to_ptr.vmem [resolvable:$true] %s16
      %22 = dma.hbm_to_vmem [thread:$0]  %s0, 256, %s17, [#allocation3], 128, 128, 8
    $region5: #{tpu_custom_call.1} parent=1 // pred_fallthru
      _
    // Predicated region
    $region6: #{tpu_custom_call.1} parent=1 // pred_check
      _
    $region7: #{tpu_custom_call.1} parent=1 // pred_check_branch
      %24 = sbr.rel (0) target = $region9
    $region8: #{tpu_custom_call.1} parent=1 // pred_region
      %s26 = ssub.s32 1024, 1024
      %27 = vsyncadd [#allocation6], %s26
      %s28 = sshll.u32 [#allocation5], 4
      %s29 = int_to_ptr.vmem [resolvable:$true] %s28
      %34 = dma.hbm_to_vmem [thread:$0]  %s1, 1024, %s29, [#allocation6], 64, 64, 4
    $region9: #{tpu_custom_call.1} parent=1 // pred_fallthru
      _
    // Predicated region
    $region10: #{tpu_custom_call.1} parent=1 // pred_check
      _
    $region11: #{tpu_custom_call.1} parent=1 // pred_check_branch
      %36 = sbr.rel (0) target = $region13
    $region12: #{tpu_custom_call.1} parent=1 // pred_region
      _
    $region13: #{tpu_custom_call.1} parent=1 // pred_fallthru
      _
    // Predicated region
    $region14: #{tpu_custom_call.1} parent=1 // pred_check
      _
    $region15: #{tpu_custom_call.1} parent=1 // pred_check_branch
      %38 = sbr.rel (0) target = $region17
    $region16: #{tpu_custom_call.1} parent=1 // pred_region
      %39 = dma.done [#allocation3], 256
    $region17: #{tpu_custom_call.1} parent=1 // pred_fallthru
      _
    // Predicated region
    $region18: #{tpu_custom_call.1} parent=1 // pred_check
      _
    $region19: #{tpu_custom_call.1} parent=1 // pred_check_branch
      %41 = sbr.rel (0) target = $region21
    $region20: #{tpu_custom_call.1} parent=1 // pred_region
      %42 = dma.done [#allocation6], 1024
    $region21: #{tpu_custom_call.1} parent=1 // pred_fallthru
      _
    %v44 = vld [vmem:[#allocation2] sm:$0xff]
    %v45 = vld [vmem:[#allocation2 + $0x8] sm:$0xff]
    %v46 = vpack.c.bf16 %v45, %v44
    %v47 = vld [vmem:[#allocation5] sm:$0xf]
    %v48 = vld [vmem:[#allocation5 + $0x4] sm:$0xf]
    %v49 = vld [vmem:[#allocation5 + $0x8] sm:$0xf]
    %v50 = vld [vmem:[#allocation5 + $0xc] sm:$0xf]
    %v51 = vld [vmem:[#allocation5 + $0x10] sm:$0xf]
    %v52 = vld [vmem:[#allocation5 + $0x14] sm:$0xf]
    %v53 = vld [vmem:[#allocation5 + $0x18] sm:$0xf]
    %v54 = vld [vmem:[#allocation5 + $0x1c] sm:$0xf]
    %v55 = vld [vmem:[#allocation5 + $0x20] sm:$0xf]
    %v56 = vld [vmem:[#allocation5 + $0x24] sm:$0xf]
    %v57 = vld [vmem:[#allocation5 + $0x28] sm:$0xf]
    %v58 = vld [vmem:[#allocation5 + $0x2c] sm:$0xf]
    %v59 = vld [vmem:[#allocation5 + $0x30] sm:$0xf]
    %v60 = vld [vmem:[#allocation5 + $0x34] sm:$0xf]
    %v61 = vld [vmem:[#allocation5 + $0x38] sm:$0xf]
    %v62 = vld [vmem:[#allocation5 + $0x3c] sm:$0xf]
    %v63 = vld [vmem:[%s2] sm:$0x1]
    %v65 = vlaneseq
    %v66 = vshrl.u32 %v65, 7
    %v67 = vsub.s32 0, %v66
    %v68 = vrot.slane %v63, %v67
    %v86 = vunpack.c.l.b16 %v47
    %v87 = vunpack.c.l.b16 %v48
    %v88 = vunpack.c.l.b16 %v49
    %v89 = vunpack.c.l.b16 %v50
    %v90 = vunpack.c.l.b16 %v51
    %v91 = vunpack.c.l.b16 %v52
    %v92 = vunpack.c.l.b16 %v53
    %v93 = vunpack.c.l.b16 %v54
    %v94 = vunpack.c.l.b16 %v55
    %v95 = vunpack.c.l.b16 %v56
    %v96 = vunpack.c.l.b16 %v57
    %v97 = vunpack.c.l.b16 %v58
    %v98 = vunpack.c.l.b16 %v59
    %v99 = vunpack.c.l.b16 %v60
    %v100 = vunpack.c.l.b16 %v61
    %v101 = vunpack.c.l.b16 %v62
    %v102 = vpack.c.b16 %v87, %v86
    %v103 = vpack.c.b16 %v89, %v88
    %v104 = vpack.c.b16 %v91, %v90
    %v105 = vpack.c.b16 %v93, %v92
    %v106 = vpack.c.b16 %v95, %v94
    %v107 = vpack.c.b16 %v97, %v96
    %v108 = vpack.c.b16 %v99, %v98
    %v109 = vpack.c.b16 %v101, %v100
    %118 = vmatprep.subr.bf16.mxu0 0
    %119 = vmatpush1.bf16.msra.mxu0 %v109
    %120 = vmatprep.subr.bf16.mxu0 0
    %121 = vmatpush1.bf16.msra.mxu0 %v108
    %122 = vmatprep.subr.bf16.mxu0 0
    %123 = vmatpush1.bf16.msra.mxu0 %v107
    %124 = vmatprep.subr.bf16.mxu0 0
    %125 = vmatpush1.bf16.msra.mxu0 %v106
    %126 = vmatprep.subr.bf16.mxu0 0
    %127 = vmatpush1.bf16.msra.mxu0 %v105
    %128 = vmatprep.subr.bf16.mxu0 0
    %129 = vmatpush1.bf16.msra.mxu0 %v104
    %130 = vmatprep.subr.bf16.mxu0 0
    %131 = vmatpush1.bf16.msra.mxu0 %v103
    %132 = vmatprep.subr.bf16.mxu0 0
    %133 = vmatpush1.bf16.msra.mxu0 %v102
    %134 = vmatprep.subr.bf16.mxu0 0
    %135 = vmatpush2.bf16.msra.mxu0 0
    %136 = vmatprep.subr.bf16.mxu0 0
    %137 = vmatpush2.bf16.msra.mxu0 0
    %138 = vmatprep.subr.bf16.mxu0 0
    %139 = vmatpush2.bf16.msra.mxu0 0
    %140 = vmatprep.subr.bf16.mxu0 0
    %141 = vmatpush2.bf16.msra.mxu0 0
    %142 = vmatprep.subr.bf16.mxu0 0
    %143 = vmatpush2.bf16.msra.mxu0 0
    %144 = vmatprep.subr.bf16.mxu0 0
    %145 = vmatpush2.bf16.msra.mxu0 0
    %146 = vmatprep.subr.bf16.mxu0 0
    %147 = vmatpush2.bf16.msra.mxu0 0
    %148 = vmatprep.subr.bf16.mxu0 0
    %149 = vmatpush2.bf16.msra.mxu0 0
    %150 = vmatprep.mubr.bf16.mxu0 0
    %151 = vmatmul.mubr.bf16.gmra.mxu0 %v46
    %v152 = vpop.f32.mrf.mxu0
    %v153 = vadd.f32 %v68, %v152
    %v154 = vpop.f32.mrf.mxu0
    %v155 = vpop.f32.mrf.mxu0
    %v156 = vadd.f32 %v68, %v155
    %v157 = vpop.f32.mrf.mxu0
    %158 = vdwg.mxu0
    %159 = vst [vmem:[#allocation7] sm:$0xff] %v153
    %160 = vst [vmem:[#allocation7 + $0x8] sm:$0xff] %v156
    // Predicated region
    $region22: #{tpu_custom_call.1} parent=1 // pred_check
      _
    $region23: #{tpu_custom_call.1} parent=1 // pred_check_branch
      %162 = sbr.rel (0) target = $region25
    $region24: #{tpu_custom_call.1} parent=1 // pred_region
      %s164 = ssub.s32 256, 256
      %165 = vsyncadd [#allocation4], %s164
      %s166 = sshll.u32 [#allocation7], 4
      %s167 = int_to_ptr.vmem [resolvable:$true] %s166
      %172 = dma.vmem_to_hbm [thread:$0]  %s167, 256, %s3, [#allocation4], 128, 128, 8
    $region25: #{tpu_custom_call.1} parent=1 // pred_fallthru
      _
    // Predicated region
    $region26: #{tpu_custom_call.1} parent=1 // pred_check
      _
    $region27: #{tpu_custom_call.1} parent=1 // pred_check_branch
      %174 = sbr.rel (0) target = $region29
    $region28: #{tpu_custom_call.1} parent=1 // pred_region
      %175 = dma.done [#allocation4], 256
    $region29: #{tpu_custom_call.1} parent=1 // pred_fallthru
      _
    %176 = vsyncpa [#allocation3], 1
    %177 = vsyncpa [#allocation6], 1
    %178 = vsyncpa [#allocation4], 1

</llo_original>
